<compile_context>
chip_gen: v7x
topology: tpu7x:2x2x1
jax: 0.10.0
libtpu: 0.0.40
codegen_flags: <defaults>
</compile_context>

<pallas_src>
import jax
import jax.numpy as jnp
import numpy as np
from jax.experimental import pallas as pl
from jax.experimental.pallas import tpu as pltpu


def _to_channels_first_kernel(x_ref, o_ref):
    # x_ref: (tn, C)  ->  o_ref: (C, tn)   (single 2-D XLU transpose)
    o_ref[...] = jnp.transpose(x_ref[...])


def to_channels_first_pallas(x_nhwc):
    """NHWC -> NCHW permute, equivalent to torch's x.permute(0, 3, 1, 2)."""
    b, h, w, c = x_nhwc.shape
    n = h * w

    # Free metadata reshape: collapse the two leading spatial dims.
    x_bnc = x_nhwc.reshape(b, n, c)

    # Pick a spatial tile size: lane-aligned (multiple of 128) and an exact
    # divisor of N so every block is full; cap the per-step input tile at
    # ~2 MiB so the double-buffered working set stays well inside VMEM even
    # on v7x (64 MiB).  If N is not 128-aligned, use the full extent (legal
    # because a block equal to the full array dim bypasses the (8,128) rule).
    itemsize = np.dtype(x_nhwc.dtype).itemsize
    tn = n
    if n % 128 == 0:
        max_rows = max(128, (2 * 1024 * 1024) // max(1, c * itemsize))
        max_rows = (max_rows // 128) * 128
        tn = min(n, max_rows)
        while n % tn != 0:
            tn -= 128
    n_tiles = n // tn

    out_bcn = pl.pallas_call(
        _to_channels_first_kernel,
        out_shape=jax.ShapeDtypeStruct((b, c, n), x_nhwc.dtype),
        grid=(b, n_tiles),
        in_specs=[pl.BlockSpec((None, tn, c), lambda i, j: (i, j, 0))],
        out_specs=pl.BlockSpec((None, c, tn), lambda i, j: (i, 0, j)),
        compiler_params=pltpu.CompilerParams(
            dimension_semantics=("parallel", "parallel")),
    )(x_bnc)

    # Free metadata reshape: split N back into (H, W) on the contiguous output.
    return out_bcn.reshape(b, c, h, w)


if __name__ == "__main__":
    key = jax.random.PRNGKey(0)

    # Small deterministic NHWC input consistent with the module.
    B, H, W, C = 2, 16, 16, 32
    x = jax.random.normal(key, (B, H, W, C), jnp.float32)

    out = jax.block_until_ready(to_channels_first_pallas(x))

    # Reference: exactly what torch's permute(0, 3, 1, 2) does.
    ref = jnp.transpose(x, (0, 3, 1, 2))

    if not np.array_equal(np.asarray(out), np.asarray(ref)):
        raise AssertionError("Pallas output does not match reference permute")
    print("KERNEL_OK")
</pallas_src>

<mosaic_0001>
module attributes {stable_mosaic.version = 11 : i64} {
  func.func @_to_channels_first_kernel(%arg0: i32, %arg1: i32, %arg2: memref<1x256x32xf32, #tpu.memory_space<vmem>>, %arg3: memref<1x32x256xf32, #tpu.memory_space<vmem>>) attributes {dimension_semantics = [#tpu.dimension_semantics<parallel>, #tpu.dimension_semantics<parallel>], iteration_bounds = array<i64: 2, 1>, scalar_prefetch = 0 : i64, scratch_operands = 0 : i64, tpu.core_type = #tpu.core_type<tc>, window_params = [{transform_indices = @transform_0, window_bounds = array<i64: 1, 256, 32>}, {transform_indices = @transform_1, window_bounds = array<i64: 1, 32, 256>}]} {
    %c0 = arith.constant 0 : index
    %c0_0 = arith.constant 0 : index
    %c0_1 = arith.constant 0 : index
    %0 = vector.load %arg2[%c0, %c0_0, %c0_1] : memref<1x256x32xf32, #tpu.memory_space<vmem>>, vector<1x256x32xf32>
    %1 = vector.shape_cast %0 : vector<1x256x32xf32> to vector<256x32xf32>
    %2 = tpu.transpose %1, [1, 0] : vector<256x32xf32> -> vector<32x256xf32>
    %c0_2 = arith.constant 0 : index
    %c0_3 = arith.constant 0 : index
    %c0_4 = arith.constant 0 : index
    %3 = vector.load %arg3[%c0_2, %c0_3, %c0_4] : memref<1x32x256xf32, #tpu.memory_space<vmem>>, vector<1x32x256xf32>
    %4 = vector.shape_cast %3 : vector<1x32x256xf32> to vector<32x256xf32>
    %5 = vector.shape_cast %2 : vector<32x256xf32> to vector<1x32x256xf32>
    tpu.vector_store %arg3[%c0_2, %c0_3, %c0_4], %5 {strides = array<i32>} : memref<1x32x256xf32, #tpu.memory_space<vmem>>, vector<1x32x256xf32>,
    return
  }
  func.func @transform_0(%arg0: i32, %arg1: i32) -> (i32, i32, i32) {
    %c0_i32 = arith.constant 0 : i32
    %c0_i32_0 = arith.constant 0 : i32
    return %arg0, %arg1, %c0_i32 : i32, i32, i32
  }
  func.func @transform_1(%arg0: i32, %arg1: i32) -> (i32, i32, i32) {
    %c0_i32 = arith.constant 0 : i32
    %c0_i32_0 = arith.constant 0 : i32
    return %arg0, %c0_i32, %arg1 : i32, i32, i32
  }
}

</mosaic_0001>

<llo_original>
// kernel: tpu_custom_call.1
$region0: #{tpu_custom_call.1}
  #allocation0 [shape = 'u32[]', space=smem, size = 0x4, offset = 0x4, fixed_abs, tag = 'smem constant byte address 0x4 - core index']
  #allocation1 [shape = 'u32[144,128]{1,0:T(1,128)}', space=vmem, size = 0x12000, scoped, tag = 'internal scratch']
  %s0 = inlined_call_operand.vmem [shape: f32[2,256,32], index: 0, kind: input, shape index: {}]
  %s1 = inlined_call_operand.hbm [shape: f32[2,32,256], index: 1, kind: output, shape index: {}]
  %s2 = sld [smem:[#allocation0]]
  $region37: #{tpu_custom_call.1} parent=0
    _
  %s4 = ssub.s32 1, %s2
  %s5 = scalar_select 0, %s4, %s2
  $region1: #{tpu_custom_call.1} parent=0
    #allocation2 [shape = 'u8[65536]{0}', space=vmem, size = 0x10000, scoped, tag = 'output window, operand 0']
    #allocation3 [shape = 's32[2]{0}', space=sflag, size = 0x8, scoped, tag = 'scoped memory for tpu_custom_call.1']
    %6 = vsyncpa [#allocation3], 0
    %s7 = scalar_lea.sflag [#allocation3], 1
    %8 = vsyncpa %s7, 0
    loop: start=0, step=1, limit=4
    $region2: #{tpu_custom_call.1} parent=1 // loop_pre_header
      _
    $region3: #{tpu_custom_call.1} parent=1 // loop_header
      %s10 = sphi 0, %s14
      %p11 = scmp.ge.s32.totalorder %s10, 4
      %s17 = sphi 0, %s29
      %s18 = sphi 0, %s25
      %s19 = sphi 0, %s17
      %s20 = sphi 0, %s18
      %s21 = sphi 0, %s19
      %s22 = sphi 0, %s20
      %s34 = sphi 0, %s36
      %s37 = sphi 0, %s34
      %s38 = sphi 0, %s37
      %s54 = sphi 0, %s38
      %s62 = sphi 0, %s64
      %s65 = sphi 0, %s62
      %s66 = sphi 0, %s65
      %s82 = sphi 0, %s66
    $region4: #{tpu_custom_call.1} parent=1 // loop_header_branch
      %13 = sbr.rel (%p11) target = $region8
    $region5: #{tpu_custom_call.1} parent=1 // loop_body
      %s15 = ssub.s32 %s10, 1
      %s16 = ssub.s32 %s10, 2
      %s23 = sadd.s32 1, %s18
      %p24 = scmp.ge.s32.totalorder %s23, 1
      %s25 = scalar_select %p24, 0, %s23
      %s26 = sadd.s32 1, %s17
      %s27 = scalar_select %p24, %s26, %s17
      %p28 = scmp.ge.s32.totalorder %s27, 2
      %s29 = scalar_select %p28, 0, %s27
      %s30 = ssub.s32 %s17, %s29
      %s31 = ssub.s32 %s18, %s25
      %s32 = sor.u32 %s30, %s31
      %p33 = scmp.eq.s32.totalorder %s32, 0
      %s35 = sadd.s32 %s34, 1
      %s36 = scalar_select %p33, %s34, %s35
      %p39 = pneg %p33
      %p40 = scmp.eq.s32.totalorder %s10, 1
      %p41 = por %p39, %p40
      %p42 = scmp.ne.s32.totalorder %s34, %s37
      %p43 = scmp.eq.s32.totalorder %s10, 0
      %p44 = por %p42, %p43
      %p45 = scmp.ne.s32.totalorder %s34, %s37
      %p46 = scmp.eq.s32.totalorder %s15, 1
      %p47 = por %p45, %p46
      %p48 = scmp.ne.s32.totalorder %s37, %s38
      %p49 = scmp.eq.s32.totalorder %s15, 0
      %p50 = por %p48, %p49
      %p51 = scmp.ne.s32.totalorder %s37, %s38
      %p52 = scmp.eq.s32.totalorder %s16, 1
      %p53 = por %p51, %p52
      %p55 = scmp.ne.s32.totalorder %s38, %s54
      %p56 = scmp.eq.s32.totalorder %s16, 0
      %p57 = por %p55, %p56
      %s58 = ssub.s32 %s17, %s29
      %s59 = ssub.s32 %s18, %s25
      %s60 = sor.u32 %s58, %s59
      %p61 = scmp.eq.s32.totalorder %s60, 0
      %s63 = sadd.s32 %s62, 1
      %s64 = scalar_select %p61, %s62, %s63
      %p67 = pneg %p61
      %p68 = scmp.eq.s32.totalorder %s10, 1
      %p69 = por %p67, %p68
      %p70 = scmp.ne.s32.totalorder %s62, %s65
      %p71 = scmp.eq.s32.totalorder %s10, 0
      %p72 = por %p70, %p71
      %p73 = scmp.ne.s32.totalorder %s62, %s65
      %p74 = scmp.eq.s32.totalorder %s15, 1
      %p75 = por %p73, %p74
      %p76 = scmp.ne.s32.totalorder %s65, %s66
      %p77 = scmp.eq.s32.totalorder %s15, 0
      %p78 = por %p76, %p77
      %p79 = scmp.ne.s32.totalorder %s65, %s66
      %p80 = scmp.eq.s32.totalorder %s16, 1
      %p81 = por %p79, %p80
      %p83 = scmp.ne.s32.totalorder %s66, %s82
      %p84 = scmp.eq.s32.totalorder %s16, 0
      %p85 = por %p83, %p84
      %p86 = scmp.le.s32.totalorder 1, %s10
      %p87 = scmp.lt.s32.totalorder %s10, 3
      %p88 = pnand %p86, %p87
      %p89 = pneg %p88
      // Predicated region
      $region9: #{tpu_custom_call.1} parent=5 // pred_check
        _
      $region10: #{tpu_custom_call.1} parent=5 // pred_check_branch
        %91 = sbr.rel (%p88) target = $region12
      $region11: #{tpu_custom_call.1} parent=5 // pred_region
        %s92 = ssub.s32 %s10, 1
      $region12: #{tpu_custom_call.1} parent=5 // pred_fallthru
        _
      %p93 = scmp.lt.s32.totalorder %s10, 2
      // Predicated region
      $region13: #{tpu_custom_call.1} parent=5 // pred_check
        %p94 = pneg %p93
      $region14: #{tpu_custom_call.1} parent=5 // pred_check_branch
        %96 = sbr.rel (%p94) target = $region16
      $region15: #{tpu_custom_call.1} parent=5 // pred_region
        // Predicated region
        $region17: #{tpu_custom_call.1} parent=15 // pred_check
          %p97 = pneg %p44
        $region18: #{tpu_custom_call.1} parent=15 // pred_check_branch
          %99 = sbr.rel (%p97) target = $region20
        $region19: #{tpu_custom_call.1} parent=15 // pred_region
          %s100 = smul.u32 32, %s18
          %p101 = scmp.lt.s32.totalorder %s17, 1
          %s102 = scalar_select %p101, %s17, 1
          %p103 = scmp.lt.s32.totalorder %s100, 31
          %s104 = scalar_select %p103, %s100, 31
          %s105 = smul.addr %s102, 32
          %s106 = sadd.s32 %s104, %s105
          %s107 = smul.addr %s106, 8
          %s108 = scalar_lea.vmem %s0, %s107
          %s109 = smul.u32 32, %s18
        $region20: #{tpu_custom_call.1} parent=15 // pred_fallthru
          _
      $region16: #{tpu_custom_call.1} parent=5 // pred_fallthru
        _
      %p110 = scmp.le.s32.totalorder 1, %s10
      %p111 = scmp.lt.s32.totalorder %s10, 3
      %p112 = pnand %p110, %p111
      %p113 = pneg %p112
      // Predicated region
      $region21: #{tpu_custom_call.1} parent=5 // pred_check
        _
      $region22: #{tpu_custom_call.1} parent=5 // pred_check_branch
        %115 = sbr.rel (%p112) target = $region24
      $region23: #{tpu_custom_call.1} parent=5 // pred_region
        %s116 = ssub.s32 %s10, 1
        %s117 = smul.u32 32, %s20
        %p118 = scmp.lt.s32.totalorder %s19, 1
        %s119 = scalar_select %p118, %s19, 1
        %p120 = scmp.lt.s32.totalorder %s117, 31
        %s121 = scalar_select %p120, %s117, 31
        %s122 = smul.addr %s119, 32
        %s123 = sadd.s32 %s121, %s122
        %s124 = smul.addr %s123, 8
        %s125 = scalar_lea.vmem %s0, %s124
        %p126 = pneg %p50
        %p127 = pneg %p47
        %p128 = pneg %p78
        %p129 = pneg %p75
        %s130 = sand.u32 %s65, 1
        %s131 = scalar_lea.sflag [#allocation3], %s130
        %s132 = sand.u32 %s65, 1
        %s133 = smul.addr %s132, 64
        %s134 = scalar_lea.vmem [#allocation2], %s133
        %s135 = smul.u32 32, %s20
        %p136 = scmp.lt.s32.totalorder %s19, 1
        %s137 = scalar_select %p136, %s19, 1
        %p138 = scmp.lt.s32.totalorder %s135, 31
        %s139 = scalar_select %p138, %s135, 31
        %s140 = smul.addr %s137, 32
        %s141 = sadd.s32 %s139, %s140
        %s142 = smul.addr %s141, 8
        %s143 = scalar_lea.vmem %s0, %s142
        %s144 = smul.u32 32, %s20
        %s145 = smul.u32 2, %s20
        %v146 = vld [vmem:[%s143] sm:$0xff]
        %v147 = vld [vmem:[%s143 + $0x8] sm:$0xff]
        %v148 = vld [vmem:[%s143 + $0x10] sm:$0xff]
        %v149 = vld [vmem:[%s143 + $0x18] sm:$0xff]
        %v150 = vld [vmem:[%s143 + $0x20] sm:$0xff]
        %v151 = vld [vmem:[%s143 + $0x28] sm:$0xff]
        %v152 = vld [vmem:[%s143 + $0x30] sm:$0xff]
        %v153 = vld [vmem:[%s143 + $0x38] sm:$0xff]
        %v154 = vld [vmem:[%s143 + $0x40] sm:$0xff]
        %v155 = vld [vmem:[%s143 + $0x48] sm:$0xff]
        %v156 = vld [vmem:[%s143 + $0x50] sm:$0xff]
        %v157 = vld [vmem:[%s143 + $0x58] sm:$0xff]
        %v158 = vld [vmem:[%s143 + $0x60] sm:$0xff]
        %v159 = vld [vmem:[%s143 + $0x68] sm:$0xff]
        %v160 = vld [vmem:[%s143 + $0x70] sm:$0xff]
        %v161 = vld [vmem:[%s143 + $0x78] sm:$0xff]
        %v162 = vld [vmem:[%s143 + $0x80] sm:$0xff]
        %v163 = vld [vmem:[%s143 + $0x88] sm:$0xff]
        %v164 = vld [vmem:[%s143 + $0x90] sm:$0xff]
        %v165 = vld [vmem:[%s143 + $0x98] sm:$0xff]
        %v166 = vld [vmem:[%s143 + $0xa0] sm:$0xff]
        %v167 = vld [vmem:[%s143 + $0xa8] sm:$0xff]
        %v168 = vld [vmem:[%s143 + $0xb0] sm:$0xff]
        %v169 = vld [vmem:[%s143 + $0xb8] sm:$0xff]
        %v170 = vld [vmem:[%s143 + $0xc0] sm:$0xff]
        %v171 = vld [vmem:[%s143 + $0xc8] sm:$0xff]
        %v172 = vld [vmem:[%s143 + $0xd0] sm:$0xff]
        %v173 = vld [vmem:[%s143 + $0xd8] sm:$0xff]
        %v174 = vld [vmem:[%s143 + $0xe0] sm:$0xff]
        %v175 = vld [vmem:[%s143 + $0xe8] sm:$0xff]
        %v176 = vld [vmem:[%s143 + $0xf0] sm:$0xff]
        %v177 = vld [vmem:[%s143 + $0xf8] sm:$0xff]
        %178 = vxpose.xlu0.b32.start [1/16] %v146, 128
        %179 = vxpose.xlu0.b32.cont [2/16] %v147, 128
        %180 = vxpose.xlu0.b32.cont [3/16] %v148, 128
        %181 = vxpose.xlu0.b32.cont [4/16] %v149, 128
        %182 = vxpose.xlu0.b32.cont [5/16] %v150, 128
        %183 = vxpose.xlu0.b32.cont [6/16] %v151, 128
        %184 = vxpose.xlu0.b32.cont [7/16] %v152, 128
        %185 = vxpose.xlu0.b32.cont [8/16] %v153, 128
        %186 = vxpose.xlu0.b32.cont [9/16] %v154, 128
        %187 = vxpose.xlu0.b32.cont [10/16] %v155, 128
        %188 = vxpose.xlu0.b32.cont [11/16] %v156, 128
        %189 = vxpose.xlu0.b32.cont [12/16] %v157, 128
        %190 = vxpose.xlu0.b32.cont [13/16] %v158, 128
        %191 = vxpose.xlu0.b32.cont [14/16] %v159, 128
        %192 = vxpose.xlu0.b32.cont [15/16] %v160, 128
        %193 = vxpose.xlu0.b32.end [16/16] %v161, 128
        %v194 = vpop.trf.xlu0
        %v195 = vpop.trf.xlu0
        %v196 = vpop.trf.xlu0
        %v197 = vpop.trf.xlu0
        %v198 = vpop.trf.xlu0
        %v199 = vpop.trf.xlu0
        %v200 = vpop.trf.xlu0
        %v201 = vpop.trf.xlu0
        %v202 = vpop.trf.xlu0
        %v203 = vpop.trf.xlu0
        %v204 = vpop.trf.xlu0
        %v205 = vpop.trf.xlu0
        %v206 = vpop.trf.xlu0
        %v207 = vpop.trf.xlu0
        %v208 = vpop.trf.xlu0
        %v209 = vpop.trf.xlu0
        %210 = vxpose.xlu0.b32.start [1/16] %v162, 128
        %211 = vxpose.xlu0.b32.cont [2/16] %v163, 128
        %212 = vxpose.xlu0.b32.cont [3/16] %v164, 128
        %213 = vxpose.xlu0.b32.cont [4/16] %v165, 128
        %214 = vxpose.xlu0.b32.cont [5/16] %v166, 128
        %215 = vxpose.xlu0.b32.cont [6/16] %v167, 128
        %216 = vxpose.xlu0.b32.cont [7/16] %v168, 128
        %217 = vxpose.xlu0.b32.cont [8/16] %v169, 128
        %218 = vxpose.xlu0.b32.cont [9/16] %v170, 128
        %219 = vxpose.xlu0.b32.cont [10/16] %v171, 128
        %220 = vxpose.xlu0.b32.cont [11/16] %v172, 128
        %221 = vxpose.xlu0.b32.cont [12/16] %v173, 128
        %222 = vxpose.xlu0.b32.cont [13/16] %v174, 128
        %223 = vxpose.xlu0.b32.cont [14/16] %v175, 128
        %224 = vxpose.xlu0.b32.cont [15/16] %v176, 128
        %225 = vxpose.xlu0.b32.end [16/16] %v177, 128
        %v226 = vpop.trf.xlu0
        %v227 = vpop.trf.xlu0
        %v228 = vpop.trf.xlu0
        %v229 = vpop.trf.xlu0
        %v230 = vpop.trf.xlu0
        %v231 = vpop.trf.xlu0
        %v232 = vpop.trf.xlu0
        %v233 = vpop.trf.xlu0
        %v234 = vpop.trf.xlu0
        %v235 = vpop.trf.xlu0
        %v236 = vpop.trf.xlu0
        %v237 = vpop.trf.xlu0
        %v238 = vpop.trf.xlu0
        %v239 = vpop.trf.xlu0
        %v240 = vpop.trf.xlu0
        %v241 = vpop.trf.xlu0
        %242 = vst [vmem:[%s134] sm:$0xff] %v194
        %243 = vst [vmem:[%s134 + $0x8] sm:$0xff] %v226
        %244 = vst [vmem:[%s134 + $0x10] sm:$0xff] %v195
        %245 = vst [vmem:[%s134 + $0x18] sm:$0xff] %v227
        %246 = vst [vmem:[%s134 + $0x20] sm:$0xff] %v196
        %247 = vst [vmem:[%s134 + $0x28] sm:$0xff] %v228
        %248 = vst [vmem:[%s134 + $0x30] sm:$0xff] %v197
        %249 = vst [vmem:[%s134 + $0x38] sm:$0xff] %v229
        %s250 = sand.u32 %s65, 1
        %s251 = scalar_lea.sflag [#allocation3], %s250
        %s252 = sand.u32 %s65, 1
        %s253 = smul.addr %s252, 64
        %s254 = scalar_lea.vmem [#allocation2], %s253
        // Predicated region
        $region25: #{tpu_custom_call.1} parent=23 // pred_check
          %p255 = pneg %p75
        $region26: #{tpu_custom_call.1} parent=23 // pred_check_branch
          %257 = sbr.rel (%p255) target = $region28
        $region27: #{tpu_custom_call.1} parent=23 // pred_region
          %s258 = smul.u32 2, %s20
          %s260 = ssub.s32 1024, 1024
          %261 = vsyncadd %s251, %s260
          %s262 = smul.addr %s19, 8
          %s263 = sadd.s32 %s258, %s262
          %s264 = smul.addr %s263, 128
          %s265 = scalar_lea.hbm %s1, %s264
          %s266 = sshll.u32 %s254, 4
          %s267 = int_to_ptr.vmem [resolvable:$true] %s266
          %272 = dma.vmem_to_hbm [thread:$0]  %s267, 1024, %s265, %s251, 256, 256, 16
        $region28: #{tpu_custom_call.1} parent=23 // pred_fallthru
          _
      $region24: #{tpu_custom_call.1} parent=5 // pred_fallthru
        _
      %p273 = scmp.le.s32.totalorder 2, %s10
      // Predicated region
      $region29: #{tpu_custom_call.1} parent=5 // pred_check
        %p274 = pneg %p273
      $region30: #{tpu_custom_call.1} parent=5 // pred_check_branch
        %276 = sbr.rel (%p274) target = $region32
      $region31: #{tpu_custom_call.1} parent=5 // pred_region
        %s277 = ssub.s32 %s10, 2
        // Predicated region
        $region33: #{tpu_custom_call.1} parent=31 // pred_check
          %p278 = pneg %p81
        $region34: #{tpu_custom_call.1} parent=31 // pred_check_branch
          %280 = sbr.rel (%p278) target = $region36
        $region35: #{tpu_custom_call.1} parent=31 // pred_region
          %s281 = sand.u32 %s66, 1
          %s282 = scalar_lea.sflag [#allocation3], %s281
          %s283 = sand.u32 %s66, 1
          %s284 = smul.addr %s283, 64
          %s285 = scalar_lea.vmem [#allocation2], %s284
          %286 = dma.done %s282, 1024
        $region36: #{tpu_custom_call.1} parent=31 // pred_fallthru
          _
      $region32: #{tpu_custom_call.1} parent=5 // pred_fallthru
        _
    $region6: #{tpu_custom_call.1} parent=1 // loop_footer
      %s14 = sadd.s32 1, %s10
    $region7: #{tpu_custom_call.1} parent=1 // loop_footer_branch
      %9 = sbr.rel target = $region3
    $region8: #{tpu_custom_call.1} parent=1 // loop_exit
      _
    %287 = vsyncpa [#allocation3], 1
    %s288 = scalar_lea.sflag [#allocation3], 1
    %289 = vsyncpa %s288, 1

</llo_original>
